<compile_context>
chip_gen: v6e
topology: v6e:2x2x1
jax: 0.10.0
libtpu: 0.0.40
codegen_flags: <defaults>
</compile_context>

<pallas_src>
import functools

import jax
import jax.numpy as jnp
from jax.experimental import pallas as pl
from jax.experimental.pallas import tpu as pltpu


_LANE = 128          # TPU lane width
_MODE_BLOCK = 512    # target lane-block width for the flattened mode axis
_COUT_BLOCK = 16     # target output-channel rows per block
_BATCH_BLOCK = 8     # target batches per grid step


def _round_up(x, m):
    return ((x + m - 1) // m) * m


def _mode_padding(mtot):
    """Lane-dense padded length of the flattened (2*m1*m2) mode axis.

    Guarantees the result is a multiple of the mode block chosen by
    `_spectral_mul_pallas` (mpad itself when <= _MODE_BLOCK, else _MODE_BLOCK).
    """
    mpad = _round_up(mtot, _LANE)
    if mpad > _MODE_BLOCK:
        mpad = _round_up(mtot, _MODE_BLOCK)
    return mpad


@functools.lru_cache(maxsize=None)
def _vmem_cap_bytes():
    """Generation-aware scoped-VMEM cap: ~85% of physical per-core VMEM."""
    try:
        cap = int(pltpu.get_tpu_info().vmem_capacity_bytes)
    except Exception:
        cap = 64 * 1024 * 1024   # assume the smallest (v7x) if the query fails
    return int(cap * 0.85)       # ~54 MiB on v7x, ~109 MiB on v5e/v6e


@functools.lru_cache(maxsize=None)
def _single_buffer_weights_supported():
    """Probe whether pipeline_mode=pl.Buffered(1) compiles and runs on this jax/TPU."""
    try:
        def _k(x_ref, o_ref):
            o_ref[...] = x_ref[...] * 2.0

        x = jnp.ones((8, 128), jnp.float32)
        y = pl.pallas_call(
            _k,
            out_shape=jax.ShapeDtypeStruct((8, 128), jnp.float32),
            grid=(1,),
            in_specs=[pl.BlockSpec((8, 128), lambda i: (0, 0),
                                   pipeline_mode=pl.Buffered(1))],
            out_specs=pl.BlockSpec((8, 128), lambda i: (0, 0)),
        )(x)
        jax.block_until_ready(y)
        return bool(jnp.allclose(y, 2.0 * x))
    except Exception:
        return False


# ----------------------------------------------------------------------------- kernel


def _spectral_mul_kernel(xr_ref, xi_ref, wa_ref, wb_ref, wc_ref, or_ref, oi_ref):
    """Complex per-mode channel contraction for one (mode, cout, batch) block.

    Block shapes seen by the kernel:
      xr_ref, xi_ref          : (Bblk, Cin,  Mblk)      real / imag of x modes
      wa_ref, wb_ref, wc_ref  : (Cin, Coutblk, Mblk)    wr, (wi - wr), (wr + wi)
      or_ref, oi_ref          : (Bblk, Coutblk, Mblk)   real / imag of output modes

    out[b, o, m] = sum_i x[b, i, m] * w[i, o, m]  (complex), 3-mult Gauss form:
      k1 = wr*(xr+xi); re += k1 - (wr+wi)*xi; im += k1 + (wi-wr)*xr
    """
    bblk, cin, mblk = xr_ref.shape
    cout_blk = wa_ref.shape[1]

    def one_batch(bb):
        def cin_step(i, carry):
            acc_r, acc_i = carry
            # TODO(synk): a stride-0 sublane-broadcast load
            #   xr_ref[bb, pl.ds(i, cout_blk, stride=0), :]
            # would move the broadcast into the vld slot; kept implicit for safety.
            xr = xr_ref[bb, pl.ds(i, 1), :]            # (1, Mblk), broadcasts over Cout
            xi = xi_ref[bb, pl.ds(i, 1), :]
            wa = wa_ref[i]                             # (Coutblk, Mblk)   wr
            wb = wb_ref[i]                             # (Coutblk, Mblk)   wi - wr
            wc = wc_ref[i]                             # (Coutblk, Mblk)   wr + wi
            k1 = wa * (xr + xi)
            return acc_r + (k1 - wc * xi), acc_i + (k1 + wb * xr)

        acc0 = (jnp.zeros((cout_blk, mblk), jnp.float32),
                jnp.zeros((cout_blk, mblk), jnp.float32))
        if cin <= 8:
            # Small static Cin: fully unrolled, pure VPU elementwise work.
            acc_r, acc_i = acc0
            for i in range(cin):
                acc_r, acc_i = cin_step(i, (acc_r, acc_i))
        else:
            # Larger Cin: bounded accumulator live ranges, modest unroll for the LLO.
            acc_r, acc_i = jax.lax.fori_loop(0, cin, cin_step, acc0, unroll=4)

        or_ref[bb] = acc_r
        oi_ref[bb] = acc_i

    if bblk == 1:
        one_batch(0)
    else:
        # Per-batch accumulation keeps vreg pressure independent of the batch block.
        def batch_body(bb, carry):
            one_batch(bb)
            return carry
        jax.lax.fori_loop(0, bblk, batch_body, 0)


def _spectral_mul_pallas(xr, xi, wa, wb, wc):
    """xr/xi: (B, Cin, Mpad) f32; wa/wb/wc: (Cin, Cout, Mpad) f32 -> 2x (B, Cout, Mpad) f32."""
    b, cin, mpad = xr.shape
    cout = wa.shape[1]

    # ---- block sizes ---------------------------------------------------------------
    mblk = mpad if mpad <= _MODE_BLOCK else _MODE_BLOCK    # lane-dense mode block
    assert mpad % mblk == 0

    # Cout block bounds the accumulator (2 * ceil(Coutblk/8) * Mblk/128 vregs) and the
    # streamed weight tile (v7x 64 MiB VMEM).  Full Cout also satisfies the (8,128) rule.
    target = _COUT_BLOCK if cin <= 128 else 8
    if cout <= target:
        cout_blk = cout
    elif cout % target == 0:
        cout_blk = target
    elif cout % 8 == 0:
        cout_blk = 8
    else:
        cout_blk = cout

    # Batch block amortizes the ~0.35us fixed cost per grid step and enlarges DMAs.
    bblk = next(d for d in range(min(b, _BATCH_BLOCK), 0, -1) if b % d == 0)

    n_m, n_co, n_b = mpad // mblk, cout // cout_blk, b // bblk
    grid = (n_m, n_co, n_b)     # batch innermost: weights re-fetched only on (m, co) change

    # Batch-invariant weights: when one tile covers the whole grid it stays resident and
    # a second pipeline buffer is pure waste -> Buffered(1) (probed once, safe fallback).
    weights_resident = (n_m == 1 and n_co == 1)
    single_buf_w = weights_resident and _single_buffer_weights_supported()
    w_kwargs = {"pipeline_mode": pl.Buffered(1)} if single_buf_w else {}

    x_spec = pl.BlockSpec((bblk, cin, mblk), lambda m, co, bb: (bb, 0, m))
    w_spec = pl.BlockSpec((cin, cout_blk, mblk), lambda m, co, bb: (0, co, m), **w_kwargs)
    o_spec = pl.BlockSpec((bblk, cout_blk, mblk), lambda m, co, bb: (bb, co, m))

    # ---- VMEM budget: exact residency, single ~1.35x headroom, generation-aware cap --
    elt = 4
    w_bufs = 1 if single_buf_w else 2
    vmem_needed = elt * (2 * 2 * bblk * cin * mblk             # xr, xi (double-buffered)
                         + 3 * w_bufs * cin * cout_blk * mblk  # wa, wb, wc
                         + 2 * 2 * bblk * cout_blk * mblk)     # out_r, out_i (double-buffered)
    vmem_limit = int(min(_vmem_cap_bytes(),
                         max(int(1.35 * vmem_needed), 32 * 1024 * 1024)))

    out_r, out_i = pl.pallas_call(
        _spectral_mul_kernel,
        out_shape=(jax.ShapeDtypeStruct((b, cout, mpad), jnp.float32),
                   jax.ShapeDtypeStruct((b, cout, mpad), jnp.float32)),
        grid=grid,
        in_specs=[x_spec, x_spec, w_spec, w_spec, w_spec],
        out_specs=(o_spec, o_spec),
        compiler_params=pltpu.CompilerParams(
            dimension_semantics=("parallel", "parallel", "parallel"),
            vmem_limit_bytes=vmem_limit),
    )(xr, xi, wa, wb, wc)
    return out_r, out_i


# ----------------------------------------------------------------------------- forward


@functools.partial(jax.jit, static_argnames=("modes1", "modes2", "out_channels"))
def _spectral_conv2d_forward(x, w_a, w_b, w_c, *, modes1, modes2, out_channels):
    b, cin, h, w = x.shape
    m1, m2 = modes1, modes2
    cout = out_channels
    wf = w // 2 + 1
    mtot = 2 * m1 * m2
    mpad = w_a.shape[-1]

    # TODO(synk): FFT / inverse FFT have no Pallas TPU primitive; done in plain JAX.
    x_ft = jnp.fft.rfft2(x)                                   # (B, Cin, H, Wf) c64

    # Two retained corner blocks, flattened onto one lane-dense mode axis.
    top = x_ft[:, :, :m1, :m2].reshape(b, cin, m1 * m2)
    bot = x_ft[:, :, h - m1:, :m2].reshape(b, cin, m1 * m2)
    x_modes = jnp.concatenate([top, bot], axis=-1)            # (B, Cin, Mtot)
    xr = jnp.real(x_modes).astype(jnp.float32)
    xi = jnp.imag(x_modes).astype(jnp.float32)
    if mpad > mtot:                                           # pad lane axis
        pad = [(0, 0), (0, 0), (0, mpad - mtot)]
        xr = jnp.pad(xr, pad)
        xi = jnp.pad(xi, pad)

    out_r, out_i = _spectral_mul_pallas(xr, xi, w_a, w_b, w_c)    # (B, Cout, Mpad) x2
    # Drop pad lanes before forming the complex array (single pass over the outputs).
    out_modes = jax.lax.complex(out_r[..., :mtot], out_i[..., :mtot])  # (B, Cout, Mtot)

    out_top = out_modes[:, :, :m1 * m2].reshape(b, cout, m1, m2)
    out_bot = out_modes[:, :, m1 * m2:].reshape(b, cout, m1, m2)

    # Assemble the full spectrum by pad + concat (no zeros buffer + scatter writes).
    pad_w = [(0, 0), (0, 0), (0, 0), (0, wf - m2)]
    top_full = jnp.pad(out_top, pad_w)
    bot_full = jnp.pad(out_bot, pad_w)
    mid = jnp.zeros((b, cout, h - 2 * m1, wf), out_modes.dtype)
    out_ft = jnp.concatenate([top_full, mid, bot_full], axis=2)   # (B, Cout, H, Wf)

    return jnp.fft.irfft2(out_ft, s=(h, w))                       # (B, Cout, H, W) f32


class SpectralConv2d:
    """JAX / Pallas re-implementation of the PyTorch SpectralConv2d forward."""

    def __init__(self, in_channels, out_channels, modes1, modes2, key):
        self.in_channels = in_channels
        self.out_channels = out_channels
        self.modes1 = modes1
        self.modes2 = modes2
        self.scale = 1.0 / (in_channels * out_channels)

        k1, k2, k3, k4 = jax.random.split(key, 4)
        shape = (in_channels, out_channels, modes1, modes2)
        # torch.rand(..., dtype=cfloat): real and imag each Uniform[0, 1).
        self.weights1 = self.scale * (
            jax.random.uniform(k1, shape, jnp.float32)
            + 1j * jax.random.uniform(k2, shape, jnp.float32)
        ).astype(jnp.complex64)
        self.weights2 = self.scale * (
            jax.random.uniform(k3, shape, jnp.float32)
            + 1j * jax.random.uniform(k4, shape, jnp.float32)
        ).astype(jnp.complex64)

        # Precompute Gauss-trick weight terms once (weights are batch-invariant):
        # both corner blocks concatenated on one lane-dense mode axis, padded so the
        # padded length is a multiple of the kernel's mode block.
        # TODO(synk): optionally store these (and xr/xi) in bf16 to halve DMA / VMEM;
        # kept f32 here to hold the 1e-4 tolerance against the reference.
        mtot = 2 * modes1 * modes2
        mpad = _mode_padding(mtot)
        w_cat = jnp.concatenate(
            [self.weights1.reshape(in_channels, out_channels, modes1 * modes2),
             self.weights2.reshape(in_channels, out_channels, modes1 * modes2)],
            axis=-1,
        )                                                     # (Cin, Cout, Mtot) c64
        wr = jnp.real(w_cat).astype(jnp.float32)
        wi = jnp.imag(w_cat).astype(jnp.float32)
        pad = [(0, 0), (0, 0), (0, mpad - mtot)]
        self._w_a = jnp.pad(wr, pad)                          # wr
        self._w_b = jnp.pad(wi - wr, pad)                     # wi - wr
        self._w_c = jnp.pad(wr + wi, pad)                     # wr + wi

        # Warm trace-time caches outside of jit (hardware query + Buffered(1) probe).
        _vmem_cap_bytes()
        _single_buffer_weights_supported()

    def __call__(self, x):
        # x: (B, Cin, H, W) float32 (NCHW, same as PyTorch).
        _, cin, h, w = x.shape
        assert cin == self.in_channels
        # Overlapping corner blocks (modes1 > H/2) would silently overwrite in the
        # reference; require the standard FNO regime.
        assert self.modes1 <= h // 2, "modes1 must be <= H // 2"
        assert self.modes2 <= w // 2 + 1, "modes2 must be <= W // 2 + 1"
        return _spectral_conv2d_forward(
            x, self._w_a, self._w_b, self._w_c,
            modes1=self.modes1, modes2=self.modes2,
            out_channels=self.out_channels)


# ----------------------------------------------------------------------------- check


def _reference_forward(module, x):
    """Pure-JAX reference (mirrors the PyTorch forward) for verification."""
    b, cin, h, w = x.shape
    m1, m2 = module.modes1, module.modes2
    cout = module.out_channels
    x_ft = jnp.fft.rfft2(x)
    out_ft = jnp.zeros((b, cout, h, w // 2 + 1), jnp.complex64)
    out_ft = out_ft.at[:, :, :m1, :m2].set(
        jnp.einsum('bixy,ioxy->boxy', x_ft[:, :, :m1, :m2], module.weights1))
    out_ft = out_ft.at[:, :, h - m1:, :m2].set(
        jnp.einsum('bixy,ioxy->boxy', x_ft[:, :, h - m1:, :m2], module.weights2))
    return jnp.fft.irfft2(out_ft, s=(h, w))


if __name__ == "__main__":
    key = jax.random.PRNGKey(0)
    k_w, k_x, k_w2, k_x2 = jax.random.split(key, 4)

    # Config 1: modes fill the retained half-spectrum exactly (Mpad == Mtot == 128).
    B, CIN, COUT, H, W = 2, 4, 4, 16, 16
    MODES1, MODES2 = 8, 8
    module = SpectralConv2d(CIN, COUT, MODES1, MODES2, k_w)
    x = jax.random.normal(k_x, (B, CIN, H, W), jnp.float32)
    y = jax.block_until_ready(module(x))
    y_ref = jax.block_until_ready(_reference_forward(module, x))
    assert y.shape == (B, COUT, H, W)
    assert jnp.allclose(y, y_ref, atol=1e-4, rtol=1e-4)

    # Config 2: odd sizes -> padded mode lanes (120 -> 128) and a different batch block.
    B2, CIN2, COUT2, H2, W2 = 3, 6, 8, 32, 32
    M1B, M2B = 6, 10
    module2 = SpectralConv2d(CIN2, COUT2, M1B, M2B, k_w2)
    x2 = jax.random.normal(k_x2, (B2, CIN2, H2, W2), jnp.float32)
    y2 = jax.block_until_ready(module2(x2))
    y2_ref = jax.block_until_ready(_reference_forward(module2, x2))
    assert y2.shape == (B2, COUT2, H2, W2)
    assert jnp.allclose(y2, y2_ref, atol=1e-4, rtol=1e-4)

    print("KERNEL_OK")
</pallas_src>

<mosaic_0001>
module attributes {stable_mosaic.version = 11 : i64} {
  func.func @_k(%arg0: i32, %arg1: memref<8x128xf32, #tpu.memory_space<vmem>>, %arg2: memref<8x128xf32, #tpu.memory_space<vmem>>) attributes {dimension_semantics = [#tpu.dimension_semantics<arbitrary>], iteration_bounds = array<i64: 1>, scalar_prefetch = 0 : i64, scratch_operands = 0 : i64, tpu.core_type = #tpu.core_type<tc>, window_params = [{pipeline_mode = #tpu.pipeline_mode<synchronous>, transform_indices = @transform_0, window_bounds = array<i64: 8, 128>}, {pipeline_mode = #tpu.pipeline_mode<synchronous>, transform_indices = @transform_1, window_bounds = array<i64: 8, 128>}]} {
    %c0 = arith.constant 0 : index
    %c0_0 = arith.constant 0 : index
    %0 = vector.load %arg1[%c0, %c0_0] : memref<8x128xf32, #tpu.memory_space<vmem>>, vector<8x128xf32>
    %cst = arith.constant 2.000000e+00 : f32
    %1 = vector.broadcast %cst : f32 to vector<8x128xf32>
    %2 = arith.mulf %0, %1 : vector<8x128xf32>
    %c0_1 = arith.constant 0 : index
    %c0_2 = arith.constant 0 : index
    %3 = vector.load %arg2[%c0_1, %c0_2] : memref<8x128xf32, #tpu.memory_space<vmem>>, vector<8x128xf32>
    tpu.vector_store %arg2[%c0_1, %c0_2], %2 {strides = array<i32>} : memref<8x128xf32, #tpu.memory_space<vmem>>, vector<8x128xf32>,
    return
  }
  func.func @transform_0(%arg0: i32) -> (i32, i32) {
    %c0_i32 = arith.constant 0 : i32
    %c0_i32_0 = arith.constant 0 : i32
    %c0_i32_1 = arith.constant 0 : i32
    return %c0_i32, %c0_i32_0 : i32, i32
  }
  func.func @transform_1(%arg0: i32) -> (i32, i32) {
    %c0_i32 = arith.constant 0 : i32
    %c0_i32_0 = arith.constant 0 : i32
    %c0_i32_1 = arith.constant 0 : i32
    return %c0_i32, %c0_i32_0 : i32, i32
  }
}

module attributes {stable_mosaic.version = 11 : i64} {
  func.func @_spectral_mul_kernel(%arg0: i32, %arg1: i32, %arg2: i32, %arg3: memref<2x4x128xf32, #tpu.memory_space<vmem>>, %arg4: memref<2x4x128xf32, #tpu.memory_space<vmem>>, %arg5: memref<4x4x128xf32, #tpu.memory_space<vmem>>, %arg6: memref<4x4x128xf32, #tpu.memory_space<vmem>>, %arg7: memref<4x4x128xf32, #tpu.memory_space<vmem>>, %arg8: memref<2x4x128xf32, #tpu.memory_space<vmem>>, %arg9: memref<2x4x128xf32, #tpu.memory_space<vmem>>) attributes {dimension_semantics = [#tpu.dimension_semantics<parallel>, #tpu.dimension_semantics<parallel>, #tpu.dimension_semantics<parallel>], iteration_bounds = array<i64: 1, 1, 1>, scalar_prefetch = 0 : i64, scratch_operands = 0 : i64, tpu.core_type = #tpu.core_type<tc>, window_params = [{transform_indices = @transform_0, window_bounds = array<i64: 2, 4, 128>}, {transform_indices = @transform_1, window_bounds = array<i64: 2, 4, 128>}, {transform_indices = @transform_2, window_bounds = array<i64: 4, 4, 128>}, {transform_indices = @transform_3, window_bounds = array<i64: 4, 4, 128>}, {transform_indices = @transform_4, window_bounds = array<i64: 4, 4, 128>}, {transform_indices = @transform_5, window_bounds = array<i64: 2, 4, 128>}, {transform_indices = @transform_6, window_bounds = array<i64: 2, 4, 128>}]} {
    %c0_i32 = arith.constant 0 : i32
    %c2_i32 = arith.constant 2 : i32
    %0 = arith.addi %c0_i32, %c2_i32 : i32
    %c1_i32 = arith.constant 1 : i32
    scf.for %arg10 = %c0_i32 to %0 step %c1_i32  : i32 {
      %cst = arith.constant 0.000000e+00 : f32
      %1 = vector.broadcast %cst : f32 to vector<4x128xf32>
      %cst_1 = arith.constant 0.000000e+00 : f32
      %2 = vector.broadcast %cst_1 : f32 to vector<4x128xf32>
      %3 = arith.index_cast %arg10 : i32 to index
      %c0 = arith.constant 0 : index
      %c0_2 = arith.constant 0 : index
      %4 = vector.load %arg3[%3, %c0, %c0_2] : memref<2x4x128xf32, #tpu.memory_space<vmem>>, vector<1x1x128xf32>
      %5 = vector.shape_cast %4 : vector<1x1x128xf32> to vector<1x128xf32>
      %6 = arith.index_cast %arg10 : i32 to index
      %c0_3 = arith.constant 0 : index
      %c0_4 = arith.constant 0 : index
      %7 = vector.load %arg4[%6, %c0_3, %c0_4] : memref<2x4x128xf32, #tpu.memory_space<vmem>>, vector<1x1x128xf32>
      %8 = vector.shape_cast %7 : vector<1x1x128xf32> to vector<1x128xf32>
      %c0_5 = arith.constant 0 : index
      %c0_6 = arith.constant 0 : index
      %c0_7 = arith.constant 0 : index
      %9 = vector.load %arg5[%c0_5, %c0_6, %c0_7] : memref<4x4x128xf32, #tpu.memory_space<vmem>>, vector<1x4x128xf32>
      %10 = vector.shape_cast %9 : vector<1x4x128xf32> to vector<4x128xf32>
      %c0_8 = arith.constant 0 : index
      %c0_9 = arith.constant 0 : index
      %c0_10 = arith.constant 0 : index
      %11 = vector.load %arg6[%c0_8, %c0_9, %c0_10] : memref<4x4x128xf32, #tpu.memory_space<vmem>>, vector<1x4x128xf32>
      %12 = vector.shape_cast %11 : vector<1x4x128xf32> to vector<4x128xf32>
      %c0_11 = arith.constant 0 : index
      %c0_12 = arith.constant 0 : index
      %c0_13 = arith.constant 0 : index
      %13 = vector.load %arg7[%c0_11, %c0_12, %c0_13] : memref<4x4x128xf32, #tpu.memory_space<vmem>>, vector<1x4x128xf32>
      %14 = vector.shape_cast %13 : vector<1x4x128xf32> to vector<4x128xf32>
      %15 = arith.addf %5, %8 : vector<1x128xf32>
      %16 = vector.broadcast %15 : vector<1x128xf32> to vector<4x128xf32>
      %17 = arith.mulf %10, %16 : vector<4x128xf32>
      %18 = vector.broadcast %8 : vector<1x128xf32> to vector<4x128xf32>
      %19 = arith.mulf %14, %18 : vector<4x128xf32>
      %20 = arith.subf %17, %19 : vector<4x128xf32>
      %21 = arith.addf %1, %20 : vector<4x128xf32>
      %22 = vector.broadcast %5 : vector<1x128xf32> to vector<4x128xf32>
      %23 = arith.mulf %12, %22 : vector<4x128xf32>
      %24 = arith.addf %17, %23 : vector<4x128xf32>
      %25 = arith.addf %2, %24 : vector<4x128xf32>
      %26 = arith.index_cast %arg10 : i32 to index
      %c1 = arith.constant 1 : index
      %c0_14 = arith.constant 0 : index
      %27 = vector.load %arg3[%26, %c1, %c0_14] : memref<2x4x128xf32, #tpu.memory_space<vmem>>, vector<1x1x128xf32>
      %28 = vector.shape_cast %27 : vector<1x1x128xf32> to vector<1x128xf32>
      %29 = arith.index_cast %arg10 : i32 to index
      %c1_15 = arith.constant 1 : index
      %c0_16 = arith.constant 0 : index
      %30 = vector.load %arg4[%29, %c1_15, %c0_16] : memref<2x4x128xf32, #tpu.memory_space<vmem>>, vector<1x1x128xf32>
      %31 = vector.shape_cast %30 : vector<1x1x128xf32> to vector<1x128xf32>
      %c1_17 = arith.constant 1 : index
      %c0_18 = arith.constant 0 : index
      %c0_19 = arith.constant 0 : index
      %32 = vector.load %arg5[%c1_17, %c0_18, %c0_19] : memref<4x4x128xf32, #tpu.memory_space<vmem>>, vector<1x4x128xf32>
      %33 = vector.shape_cast %32 : vector<1x4x128xf32> to vector<4x128xf32>
      %c1_20 = arith.constant 1 : index
      %c0_21 = arith.constant 0 : index
      %c0_22 = arith.constant 0 : index
      %34 = vector.load %arg6[%c1_20, %c0_21, %c0_22] : memref<4x4x128xf32, #tpu.memory_space<vmem>>, vector<1x4x128xf32>
      %35 = vector.shape_cast %34 : vector<1x4x128xf32> to vector<4x128xf32>
      %c1_23 = arith.constant 1 : index
      %c0_24 = arith.constant 0 : index
      %c0_25 = arith.constant 0 : index
      %36 = vector.load %arg7[%c1_23, %c0_24, %c0_25] : memref<4x4x128xf32, #tpu.memory_space<vmem>>, vector<1x4x128xf32>
      %37 = vector.shape_cast %36 : vector<1x4x128xf32> to vector<4x128xf32>
      %38 = arith.addf %28, %31 : vector<1x128xf32>
      %39 = vector.broadcast %38 : vector<1x128xf32> to vector<4x128xf32>
      %40 = arith.mulf %33, %39 : vector<4x128xf32>
      %41 = vector.broadcast %31 : vector<1x128xf32> to vector<4x128xf32>
      %42 = arith.mulf %37, %41 : vector<4x128xf32>
      %43 = arith.subf %40, %42 : vector<4x128xf32>
      %44 = arith.addf %21, %43 : vector<4x128xf32>
      %45 = vector.broadcast %28 : vector<1x128xf32> to vector<4x128xf32>
      %46 = arith.mulf %35, %45 : vector<4x128xf32>
      %47 = arith.addf %40, %46 : vector<4x128xf32>
      %48 = arith.addf %25, %47 : vector<4x128xf32>
      %49 = arith.index_cast %arg10 : i32 to index
      %c2 = arith.constant 2 : index
      %c0_26 = arith.constant 0 : index
      %50 = vector.load %arg3[%49, %c2, %c0_26] : memref<2x4x128xf32, #tpu.memory_space<vmem>>, vector<1x1x128xf32>
      %51 = vector.shape_cast %50 : vector<1x1x128xf32> to vector<1x128xf32>
      %52 = arith.index_cast %arg10 : i32 to index
      %c2_27 = arith.constant 2 : index
      %c0_28 = arith.constant 0 : index
      %53 = vector.load %arg4[%52, %c2_27, %c0_28] : memref<2x4x128xf32, #tpu.memory_space<vmem>>, vector<1x1x128xf32>
      %54 = vector.shape_cast %53 : vector<1x1x128xf32> to vector<1x128xf32>
      %c2_29 = arith.constant 2 : index
      %c0_30 = arith.constant 0 : index
      %c0_31 = arith.constant 0 : index
      %55 = vector.load %arg5[%c2_29, %c0_30, %c0_31] : memref<4x4x128xf32, #tpu.memory_space<vmem>>, vector<1x4x128xf32>
      %56 = vector.shape_cast %55 : vector<1x4x128xf32> to vector<4x128xf32>
      %c2_32 = arith.constant 2 : index
      %c0_33 = arith.constant 0 : index
      %c0_34 = arith.constant 0 : index
      %57 = vector.load %arg6[%c2_32, %c0_33, %c0_34] : memref<4x4x128xf32, #tpu.memory_space<vmem>>, vector<1x4x128xf32>
      %58 = vector.shape_cast %57 : vector<1x4x128xf32> to vector<4x128xf32>
      %c2_35 = arith.constant 2 : index
      %c0_36 = arith.constant 0 : index
      %c0_37 = arith.constant 0 : index
      %59 = vector.load %arg7[%c2_35, %c0_36, %c0_37] : memref<4x4x128xf32, #tpu.memory_space<vmem>>, vector<1x4x128xf32>
      %60 = vector.shape_cast %59 : vector<1x4x128xf32> to vector<4x128xf32>
      %61 = arith.addf %51, %54 : vector<1x128xf32>
      %62 = vector.broadcast %61 : vector<1x128xf32> to vector<4x128xf32>
      %63 = arith.mulf %56, %62 : vector<4x128xf32>
      %64 = vector.broadcast %54 : vector<1x128xf32> to vector<4x128xf32>
      %65 = arith.mulf %60, %64 : vector<4x128xf32>
      %66 = arith.subf %63, %65 : vector<4x128xf32>
      %67 = arith.addf %44, %66 : vector<4x128xf32>
      %68 = vector.broadcast %51 : vector<1x128xf32> to vector<4x128xf32>
      %69 = arith.mulf %58, %68 : vector<4x128xf32>
      %70 = arith.addf %63, %69 : vector<4x128xf32>
      %71 = arith.addf %48, %70 : vector<4x128xf32>
      %72 = arith.index_cast %arg10 : i32 to index
      %c3 = arith.constant 3 : index
      %c0_38 = arith.constant 0 : index
      %73 = vector.load %arg3[%72, %c3, %c0_38] : memref<2x4x128xf32, #tpu.memory_space<vmem>>, vector<1x1x128xf32>
      %74 = vector.shape_cast %73 : vector<1x1x128xf32> to vector<1x128xf32>
      %75 = arith.index_cast %arg10 : i32 to index
      %c3_39 = arith.constant 3 : index
      %c0_40 = arith.constant 0 : index
      %76 = vector.load %arg4[%75, %c3_39, %c0_40] : memref<2x4x128xf32, #tpu.memory_space<vmem>>, vector<1x1x128xf32>
      %77 = vector.shape_cast %76 : vector<1x1x128xf32> to vector<1x128xf32>
      %c3_41 = arith.constant 3 : index
      %c0_42 = arith.constant 0 : index
      %c0_43 = arith.constant 0 : index
      %78 = vector.load %arg5[%c3_41, %c0_42, %c0_43] : memref<4x4x128xf32, #tpu.memory_space<vmem>>, vector<1x4x128xf32>
      %79 = vector.shape_cast %78 : vector<1x4x128xf32> to vector<4x128xf32>
      %c3_44 = arith.constant 3 : index
      %c0_45 = arith.constant 0 : index
      %c0_46 = arith.constant 0 : index
      %80 = vector.load %arg6[%c3_44, %c0_45, %c0_46] : memref<4x4x128xf32, #tpu.memory_space<vmem>>, vector<1x4x128xf32>
      %81 = vector.shape_cast %80 : vector<1x4x128xf32> to vector<4x128xf32>
      %c3_47 = arith.constant 3 : index
      %c0_48 = arith.constant 0 : index
      %c0_49 = arith.constant 0 : index
      %82 = vector.load %arg7[%c3_47, %c0_48, %c0_49] : memref<4x4x128xf32, #tpu.memory_space<vmem>>, vector<1x4x128xf32>
      %83 = vector.shape_cast %82 : vector<1x4x128xf32> to vector<4x128xf32>
      %84 = arith.addf %74, %77 : vector<1x128xf32>
      %85 = vector.broadcast %84 : vector<1x128xf32> to vector<4x128xf32>
      %86 = arith.mulf %79, %85 : vector<4x128xf32>
      %87 = vector.broadcast %77 : vector<1x128xf32> to vector<4x128xf32>
      %88 = arith.mulf %83, %87 : vector<4x128xf32>
      %89 = arith.subf %86, %88 : vector<4x128xf32>
      %90 = arith.addf %67, %89 : vector<4x128xf32>
      %91 = vector.broadcast %74 : vector<1x128xf32> to vector<4x128xf32>
      %92 = arith.mulf %81, %91 : vector<4x128xf32>
      %93 = arith.addf %86, %92 : vector<4x128xf32>
      %94 = arith.addf %71, %93 : vector<4x128xf32>
      %95 = arith.index_cast %arg10 : i32 to index
      %c0_50 = arith.constant 0 : index
      %c0_51 = arith.constant 0 : index
      %96 = vector.load %arg8[%95, %c0_50, %c0_51] : memref<2x4x128xf32, #tpu.memory_space<vmem>>, vector<1x4x128xf32>
      %97 = vector.shape_cast %96 : vector<1x4x128xf32> to vector<4x128xf32>
      %98 = vector.shape_cast %90 : vector<4x128xf32> to vector<1x4x128xf32>
      tpu.vector_store %arg8[%95, %c0_50, %c0_51], %98 {strides = array<i32>} : memref<2x4x128xf32, #tpu.memory_space<vmem>>, vector<1x4x128xf32>,
      %99 = arith.index_cast %arg10 : i32 to index
      %c0_52 = arith.constant 0 : index
      %c0_53 = arith.constant 0 : index
      %100 = vector.load %arg9[%99, %c0_52, %c0_53] : memref<2x4x128xf32, #tpu.memory_space<vmem>>, vector<1x4x128xf32>
      %101 = vector.shape_cast %100 : vector<1x4x128xf32> to vector<4x128xf32>
      %102 = vector.shape_cast %94 : vector<4x128xf32> to vector<1x4x128xf32>
      tpu.vector_store %arg9[%99, %c0_52, %c0_53], %102 {strides = array<i32>} : memref<2x4x128xf32, #tpu.memory_space<vmem>>, vector<1x4x128xf32>,
    }
    %c2_i32_0 = arith.constant 2 : i32
    return
  }
  func.func @transform_0(%arg0: i32, %arg1: i32, %arg2: i32) -> (i32, i32, i32) {
    %c0_i32 = arith.constant 0 : i32
    %c0_i32_0 = arith.constant 0 : i32
    return %arg2, %c0_i32, %arg0 : i32, i32, i32
  }
  func.func @transform_1(%arg0: i32, %arg1: i32, %arg2: i32) -> (i32, i32, i32) {
    %c0_i32 = arith.constant 0 : i32
    %c0_i32_0 = arith.constant 0 : i32
    return %arg2, %c0_i32, %arg0 : i32, i32, i32
  }
  func.func @transform_2(%arg0: i32, %arg1: i32, %arg2: i32) -> (i32, i32, i32) {
    %c0_i32 = arith.constant 0 : i32
    %c0_i32_0 = arith.constant 0 : i32
    return %c0_i32, %arg1, %arg0 : i32, i32, i32
  }
  func.func @transform_3(%arg0: i32, %arg1: i32, %arg2: i32) -> (i32, i32, i32) {
    %c0_i32 = arith.constant 0 : i32
    %c0_i32_0 = arith.constant 0 : i32
    return %c0_i32, %arg1, %arg0 : i32, i32, i32
  }
  func.func @transform_4(%arg0: i32, %arg1: i32, %arg2: i32) -> (i32, i32, i32) {
    %c0_i32 = arith.constant 0 : i32
    %c0_i32_0 = arith.constant 0 : i32
    return %c0_i32, %arg1, %arg0 : i32, i32, i32
  }
  func.func @transform_5(%arg0: i32, %arg1: i32, %arg2: i32) -> (i32, i32, i32) {
    %c0_i32 = arith.constant 0 : i32
    return %arg2, %arg1, %arg0 : i32, i32, i32
  }
  func.func @transform_6(%arg0: i32, %arg1: i32, %arg2: i32) -> (i32, i32, i32) {
    %c0_i32 = arith.constant 0 : i32
    return %arg2, %arg1, %arg0 : i32, i32, i32
  }
}

</mosaic_0001>

<llo_original>
// kernel: tpu_custom_call.1
$region0: #{tpu_custom_call.1}
  #allocation0 [shape = 'u32[]', space=smem, size = 0x4, offset = 0x4, fixed_abs, tag = 'smem constant byte address 0x4 - core index']
  #allocation1 [shape = 'u32[144,128]{1,0:T(1,128)}', space=vmem, size = 0x12000, scoped, tag = 'internal scratch']
  %s0 = inlined_call_operand.hbm [shape: f32[8,128], index: 0, kind: input, shape index: {}]
  %s1 = inlined_call_operand.hbm [shape: f32[8,128], index: 1, kind: output, shape index: {}]
  %s2 = sld [smem:[#allocation0]]
  $region18: #{tpu_custom_call.1} parent=0
    _
  %s4 = ssub.s32 1, %s2
  %s5 = scalar_select 0, %s4, %s2
  $region1: #{tpu_custom_call.1} parent=0
    #allocation2 [shape = 'u8[4096]{0}', space=vmem, size = 0x1000, scoped, tag = 'input window, operand 0, single buffered']
    #allocation3 [shape = 's32[1]{0}', space=sflag, size = 0x4, scoped, tag = 'scoped memory for tpu_custom_call.1']
    #allocation4 [shape = 's32[1]{0}', space=sflag, size = 0x4, scoped, tag = 'scoped memory for tpu_custom_call.1']
    #allocation5 [shape = 'u8[4096]{0}', space=vmem, size = 0x1000, scoped, tag = 'output window, operand 0, single buffered']
    %6 = vsyncpa [#allocation3], 0
    %7 = vsyncpa [#allocation4], 0
    // Predicated region
    $region2: #{tpu_custom_call.1} parent=1 // pred_check
      _
    $region3: #{tpu_custom_call.1} parent=1 // pred_check_branch
      %9 = sbr.rel (0) target = $region5
    $region4: #{tpu_custom_call.1} parent=1 // pred_region
      %s11 = ssub.s32 128, 128
      %12 = vsyncadd [#allocation3], %s11
      %s14 = sshll.u32 [#allocation2], 4
      %s15 = int_to_ptr.vmem [resolvable:$true] %s14
      %17 = dma.hbm_to_vmem [thread:$0]  %s0, 128, %s15, [#allocation3]
    $region5: #{tpu_custom_call.1} parent=1 // pred_fallthru
      _
    // Predicated region
    $region6: #{tpu_custom_call.1} parent=1 // pred_check
      _
    $region7: #{tpu_custom_call.1} parent=1 // pred_check_branch
      %19 = sbr.rel (0) target = $region9
    $region8: #{tpu_custom_call.1} parent=1 // pred_region
      %20 = dma.done [#allocation3], 128
    $region9: #{tpu_custom_call.1} parent=1 // pred_fallthru
      _
    %v21 = vld [vmem:[#allocation2] sm:$0xff]
    %v22 = vmul.f32 %v21, 2.0
    %23 = vst [vmem:[#allocation5] sm:$0xff] %v22
    // Predicated region
    $region10: #{tpu_custom_call.1} parent=1 // pred_check
      _
    $region11: #{tpu_custom_call.1} parent=1 // pred_check_branch
      %25 = sbr.rel (0) target = $region13
    $region12: #{tpu_custom_call.1} parent=1 // pred_region
      %s27 = ssub.s32 128, 128
      %28 = vsyncadd [#allocation4], %s27
      %s30 = sshll.u32 [#allocation5], 4
      %s31 = int_to_ptr.vmem [resolvable:$true] %s30
      %33 = dma.vmem_to_hbm [thread:$0]  %s31, 128, %s1, [#allocation4]
    $region13: #{tpu_custom_call.1} parent=1 // pred_fallthru
      _
    // Predicated region
    $region14: #{tpu_custom_call.1} parent=1 // pred_check
      _
    $region15: #{tpu_custom_call.1} parent=1 // pred_check_branch
      %35 = sbr.rel (0) target = $region17
    $region16: #{tpu_custom_call.1} parent=1 // pred_region
      %36 = dma.done [#allocation4], 128
    $region17: #{tpu_custom_call.1} parent=1 // pred_fallthru
      _
    %37 = vsyncpa [#allocation3], 1
    %38 = vsyncpa [#allocation4], 1

// kernel: reverse.1
$region0: #{reverse.1}
  %s0 = inlined_call_operand.vmem [shape: f32[2,4,16,7], index: 0, kind: input, shape index: {}]
  %s1 = inlined_call_operand.vmem [shape: f32[2,4,16,7], index: 1, kind: output, shape index: {}]
  $region1: #{reverse.1} parent=0
    #allocation0 [shape = 'u8[65536]{0}', space=vmem, size = 0x10000, scoped, tag = 'operand span for operand 0']
    #allocation1 [shape = 'u8[32768]{0}', space=vmem, size = 0x8000, scoped, tag = 'operand span for operand 1']
    %s2 = scalar_lea.vmem [#allocation0], 8
    // Predicated region
    $region2: #{reverse.1} parent=1 // pred_check
      _
    $region3: #{reverse.1} parent=1 // pred_check_branch
      %4 = sbr.rel (0) target = $region5
    $region4: #{reverse.1} parent=1 // pred_region
      // Predicated region
      $region6: #{reverse.1} parent=4 // pred_check
        _
      $region7: #{reverse.1} parent=4 // pred_check_branch
        %6 = sbr.rel (0) target = $region9
      $region8: #{reverse.1} parent=4 // pred_region
        // Predicated region
        $region21: #{reverse.1} parent=8 // pred_check
          _
        $region22: #{reverse.1} parent=8 // pred_check_branch
          %36 = sbr.rel (0) target = $region24
        $region23: #{reverse.1} parent=8 // pred_region
          loop: start=0, step=1, limit=1
          $region25: #{reverse.1} parent=23 // loop_pre_header
            _
          $region26: #{reverse.1} parent=23 // loop_header
            %s38 = sphi 0, %s42
            %p39 = scmp.ge.s32.totalorder %s38, 1
            %s43 = sphi %s0, %s0
            %s44 = sphi %s2, %s2
          $region27: #{reverse.1} parent=23 // loop_header_branch
            %41 = sbr.rel (%p39) target = $region31
          $region28: #{reverse.1} parent=23 // loop_body
            %v45 = vld [vmem:[%s43] sm:$0xff]
            %46 = vst [vmem:[%s44] sm:$0xff] %v45
            %v47 = vld [vmem:[%s43 + $0x8] sm:$0xff]
            %48 = vst [vmem:[%s44 + $0x10] sm:$0xff] %v47
            %v49 = vld [vmem:[%s43 + $0x10] sm:$0xff]
            %50 = vst [vmem:[%s44 + $0x20] sm:$0xff] %v49
            %v51 = vld [vmem:[%s43 + $0x18] sm:$0xff]
            %52 = vst [vmem:[%s44 + $0x30] sm:$0xff] %v51
            %v53 = vld [vmem:[%s43 + $0x20] sm:$0xff]
            %54 = vst [vmem:[%s44 + $0x40] sm:$0xff] %v53
            %v55 = vld [vmem:[%s43 + $0x28] sm:$0xff]
            %56 = vst [vmem:[%s44 + $0x50] sm:$0xff] %v55
            %v57 = vld [vmem:[%s43 + $0x30] sm:$0xff]
            %58 = vst [vmem:[%s44 + $0x60] sm:$0xff] %v57
            %v59 = vld [vmem:[%s43 + $0x38] sm:$0xff]
            %60 = vst [vmem:[%s44 + $0x70] sm:$0xff] %v59
          $region29: #{reverse.1} parent=23 // loop_footer
            %s42 = sadd.s32 1, %s38
          $region30: #{reverse.1} parent=23 // loop_footer_branch
            %37 = sbr.rel target = $region26
          $region31: #{reverse.1} parent=23 // loop_exit
            _
        $region24: #{reverse.1} parent=8 // pred_fallthru
          _
        // Predicated region
        $region32: #{reverse.1} parent=8 // pred_check
          _
        $region33: #{reverse.1} parent=8 // pred_check_branch
          %62 = sbr.rel target = $region35
        $region34: #{reverse.1} parent=8 // pred_region
          _
        $region35: #{reverse.1} parent=8 // pred_fallthru
          _
      $region9: #{reverse.1} parent=4 // pred_fallthru
        _
      // Predicated region
      $region10: #{reverse.1} parent=4 // pred_check
        _
      $region11: #{reverse.1} parent=4 // pred_check_branch
        %8 = sbr.rel target = $region13
      $region12: #{reverse.1} parent=4 // pred_region
        %s10 = ssub.s32 256, 1
        loop: start=0, step=1, limit=1
        $region14: #{reverse.1} parent=12 // loop_pre_header
          _
        $region15: #{reverse.1} parent=12 // loop_header
          %s12 = sphi 0, %s16
          %p13 = scmp.ge.s32.totalorder %s12, 1
          %s17 = sphi %s0, %s0
          %s18 = sphi %s2, %s2
        $region16: #{reverse.1} parent=12 // loop_header_branch
          %15 = sbr.rel (%p13) target = $region20
        $region17: #{reverse.1} parent=12 // loop_body
          %v19 = vld [vmem:[%s17] sm:%s10]
          %20 = vst [vmem:[%s18] sm:%s10] %v19
          %v21 = vld [vmem:[%s17 + $0x8] sm:%s10]
          %22 = vst [vmem:[%s18 + $0x10] sm:%s10] %v21
          %v23 = vld [vmem:[%s17 + $0x10] sm:%s10]
          %24 = vst [vmem:[%s18 + $0x20] sm:%s10] %v23
          %v25 = vld [vmem:[%s17 + $0x18] sm:%s10]
          %26 = vst [vmem:[%s18 + $0x30] sm:%s10] %v25
          %v27 = vld [vmem:[%s17 + $0x20] sm:%s10]
          %28 = vst [vmem:[%s18 + $0x40] sm:%s10] %v27
          %v29 = vld [vmem:[%s17 + $0x28] sm:%s10]
          %30 = vst [vmem:[%s18 + $0x50] sm:%s10] %v29
          %v31 = vld [vmem:[%s17 + $0x30] sm:%s10]
          %32 = vst [vmem:[%s18 + $0x60] sm:%s10] %v31
          %v33 = vld [vmem:[%s17 + $0x38] sm:%s10]
          %34 = vst [vmem:[%s18 + $0x70] sm:%s10] %v33
        $region18: #{reverse.1} parent=12 // loop_footer
          %s16 = sadd.s32 1, %s12
        $region19: #{reverse.1} parent=12 // loop_footer_branch
          %11 = sbr.rel target = $region15
        $region20: #{reverse.1} parent=12 // loop_exit
          _
      $region13: #{reverse.1} parent=4 // pred_fallthru
        _
    $region5: #{reverse.1} parent=1 // pred_fallthru
      _
    %63 = vnop
    %s64 = scalar_lea.vmem [#allocation0], 7
    %v65 = vld [vmem:[%s64] ss:$-1 sm:$0xff]
    %v66 = vrot.slane %v65, 1
    %67 = vst [vmem:[#allocation1] sm:$0xff] %v66
    %s68 = scalar_lea.vmem [#allocation0], 8
    %s69 = scalar_lea.vmem %s68, 7 [#allocation0]
    %v70 = vld [vmem:[%s69] ss:$-1 sm:$0xff]
    %v71 = vrot.slane %v70, 1
    %v72 = vlaneseq
    %v73 = vshrl.u32 %v72, 7
    %vm74 = vcmp.lt.s32.totalorder %v73, 7
    %75 = vst.msk [vmem:[#allocation1] sm:$0xff] %vm74, %v71
    %s76 = scalar_lea.vmem [#allocation1], 8
    %s77 = scalar_lea.vmem [#allocation0], 16
    %s78 = scalar_lea.vmem %s77, 7 [#allocation0]
    %v79 = vld [vmem:[%s78] ss:$-1 sm:$0xff]
    %v80 = vrot.slane %v79, 1
    %81 = vst [vmem:[%s76] sm:$0xff] %v80
    %s82 = scalar_lea.vmem %s77, 8 [#allocation0]
    %s83 = scalar_lea.vmem %s82, 7 [#allocation0]
    %v84 = vld [vmem:[%s83] ss:$-1 sm:$0xff]
    %v85 = vrot.slane %v84, 1
    %v86 = vlaneseq
    %v87 = vshrl.u32 %v86, 7
    %vm88 = vcmp.lt.s32.totalorder %v87, 7
    %89 = vst.msk [vmem:[%s76] sm:$0xff] %vm88, %v85
    %s90 = scalar_lea.vmem [#allocation1], 16
    %s91 = scalar_lea.vmem [#allocation0], 32
    %s92 = scalar_lea.vmem %s91, 7 [#allocation0]
    %v93 = vld [vmem:[%s92] ss:$-1 sm:$0xff]
    %v94 = vrot.slane %v93, 1
    %95 = vst [vmem:[%s90] sm:$0xff] %v94
    %s96 = scalar_lea.vmem %s91, 8 [#allocation0]
    %s97 = scalar_lea.vmem %s96, 7 [#allocation0]
    %v98 = vld [vmem:[%s97] ss:$-1 sm:$0xff]
    %v99 = vrot.slane %v98, 1
    %v100 = vlaneseq
    %v101 = vshrl.u32 %v100, 7
    %vm102 = vcmp.lt.s32.totalorder %v101, 7
    %103 = vst.msk [vmem:[%s90] sm:$0xff] %vm102, %v99
    %s104 = scalar_lea.vmem [#allocation1], 24
    %s105 = scalar_lea.vmem [#allocation0], 48
    %s106 = scalar_lea.vmem %s105, 7 [#allocation0]
    %v107 = vld [vmem:[%s106] ss:$-1 sm:$0xff]
    %v108 = vrot.slane %v107, 1
    %109 = vst [vmem:[%s104] sm:$0xff] %v108
    %s110 = scalar_lea.vmem %s105, 8 [#allocation0]
    %s111 = scalar_lea.vmem %s110, 7 [#allocation0]
    %v112 = vld [vmem:[%s111] ss:$-1 sm:$0xff]
    %v113 = vrot.slane %v112, 1
    %v114 = vlaneseq
    %v115 = vshrl.u32 %v114, 7
    %vm116 = vcmp.lt.s32.totalorder %v115, 7
    %117 = vst.msk [vmem:[%s104] sm:$0xff] %vm116, %v113
    %s118 = scalar_lea.vmem [#allocation1], 32
    %s119 = scalar_lea.vmem [#allocation0], 64
    %s120 = scalar_lea.vmem %s119, 7 [#allocation0]
    %v121 = vld [vmem:[%s120] ss:$-1 sm:$0xff]
    %v122 = vrot.slane %v121, 1
    %123 = vst [vmem:[%s118] sm:$0xff] %v122
    %s124 = scalar_lea.vmem %s119, 8 [#allocation0]
    %s125 = scalar_lea.vmem %s124, 7 [#allocation0]
    %v126 = vld [vmem:[%s125] ss:$-1 sm:$0xff]
    %v127 = vrot.slane %v126, 1
    %v128 = vlaneseq
    %v129 = vshrl.u32 %v128, 7
    %vm130 = vcmp.lt.s32.totalorder %v129, 7
    %131 = vst.msk [vmem:[%s118] sm:$0xff] %vm130, %v127
    %s132 = scalar_lea.vmem [#allocation1], 40
    %s133 = scalar_lea.vmem [#allocation0], 80
    %s134 = scalar_lea.vmem %s133, 7 [#allocation0]
    %v135 = vld [vmem:[%s134] ss:$-1 sm:$0xff]
    %v136 = vrot.slane %v135, 1
    %137 = vst [vmem:[%s132] sm:$0xff] %v136
    %s138 = scalar_lea.vmem %s133, 8 [#allocation0]
    %s139 = scalar_lea.vmem %s138, 7 [#allocation0]
    %v140 = vld [vmem:[%s139] ss:$-1 sm:$0xff]
    %v141 = vrot.slane %v140, 1
    %v142 = vlaneseq
    %v143 = vshrl.u32 %v142, 7
    %vm144 = vcmp.lt.s32.totalorder %v143, 7
    %145 = vst.msk [vmem:[%s132] sm:$0xff] %vm144, %v141
    %s146 = scalar_lea.vmem [#allocation1], 48
    %s147 = scalar_lea.vmem [#allocation0], 96
    %s148 = scalar_lea.vmem %s147, 7 [#allocation0]
    %v149 = vld [vmem:[%s148] ss:$-1 sm:$0xff]
    %v150 = vrot.slane %v149, 1
    %151 = vst [vmem:[%s146] sm:$0xff] %v150
    %s152 = scalar_lea.vmem %s147, 8 [#allocation0]
    %s153 = scalar_lea.vmem %s152, 7 [#allocation0]
    %v154 = vld [vmem:[%s153] ss:$-1 sm:$0xff]
    %v155 = vrot.slane %v154, 1
    %v156 = vlaneseq
    %v157 = vshrl.u32 %v156, 7
    %vm158 = vcmp.lt.s32.totalorder %v157, 7
    %159 = vst.msk [vmem:[%s146] sm:$0xff] %vm158, %v155
    %s160 = scalar_lea.vmem [#allocation1], 56
    %s161 = scalar_lea.vmem [#allocation0], 112
    %s162 = scalar_lea.vmem %s161, 7 [#allocation0]
    %v163 = vld [vmem:[%s162] ss:$-1 sm:$0xff]
    %v164 = vrot.slane %v163, 1
    %165 = vst [vmem:[%s160] sm:$0xff] %v164
    %s166 = scalar_lea.vmem %s161, 8 [#allocation0]
    %s167 = scalar_lea.vmem %s166, 7 [#allocation0]
    %v168 = vld [vmem:[%s167] ss:$-1 sm:$0xff]
    %v169 = vrot.slane %v168, 1
    %v170 = vlaneseq
    %v171 = vshrl.u32 %v170, 7
    %vm172 = vcmp.lt.s32.totalorder %v171, 7
    %173 = vst.msk [vmem:[%s160] sm:$0xff] %vm172, %v169
    // Predicated region
    $region36: #{reverse.1} parent=1 // pred_check
      _
    $region37: #{reverse.1} parent=1 // pred_check_branch
      %175 = sbr.rel (0) target = $region39
    $region38: #{reverse.1} parent=1 // pred_region
      // Predicated region
      $region40: #{reverse.1} parent=38 // pred_check
        _
      $region41: #{reverse.1} parent=38 // pred_check_branch
        %177 = sbr.rel (0) target = $region43
      $region42: #{reverse.1} parent=38 // pred_region
        // Predicated region
        $region55: #{reverse.1} parent=42 // pred_check
          _
        $region56: #{reverse.1} parent=42 // pred_check_branch
          %207 = sbr.rel (0) target = $region58
        $region57: #{reverse.1} parent=42 // pred_region
          loop: start=0, step=1, limit=1
          $region59: #{reverse.1} parent=57 // loop_pre_header
            _
          $region60: #{reverse.1} parent=57 // loop_header
            %s209 = sphi 0, %s213
            %p210 = scmp.ge.s32.totalorder %s209, 1
            %s214 = sphi [#allocation1], [#allocation1]
            %s215 = sphi %s1, %s1
          $region61: #{reverse.1} parent=57 // loop_header_branch
            %212 = sbr.rel (%p210) target = $region65
          $region62: #{reverse.1} parent=57 // loop_body
            %v216 = vld [vmem:[%s214] sm:$0xff]
            %217 = vst [vmem:[%s215] sm:$0xff] %v216
            %v218 = vld [vmem:[%s214 + $0x8] sm:$0xff]
            %219 = vst [vmem:[%s215 + $0x8] sm:$0xff] %v218
            %v220 = vld [vmem:[%s214 + $0x10] sm:$0xff]
            %221 = vst [vmem:[%s215 + $0x10] sm:$0xff] %v220
            %v222 = vld [vmem:[%s214 + $0x18] sm:$0xff]
            %223 = vst [vmem:[%s215 + $0x18] sm:$0xff] %v222
            %v224 = vld [vmem:[%s214 + $0x20] sm:$0xff]
            %225 = vst [vmem:[%s215 + $0x20] sm:$0xff] %v224
            %v226 = vld [vmem:[%s214 + $0x28] sm:$0xff]
            %227 = vst [vmem:[%s215 + $0x28] sm:$0xff] %v226
            %v228 = vld [vmem:[%s214 + $0x30] sm:$0xff]
            %229 = vst [vmem:[%s215 + $0x30] sm:$0xff] %v228
            %v230 = vld [vmem:[%s214 + $0x38] sm:$0xff]
            %231 = vst [vmem:[%s215 + $0x38] sm:$0xff] %v230
          $region63: #{reverse.1} parent=57 // loop_footer
            %s213 = sadd.s32 1, %s209
          $region64: #{reverse.1} parent=57 // loop_footer_branch
            %208 = sbr.rel target = $region60
          $region65: #{reverse.1} parent=57 // loop_exit
            _
        $region58: #{reverse.1} parent=42 // pred_fallthru
          _
        // Predicated region
        $region66: #{reverse.1} parent=42 // pred_check
          _
        $region67: #{reverse.1} parent=42 // pred_check_branch
          %233 = sbr.rel target = $region69
        $region68: #{reverse.1} parent=42 // pred_region
          _
        $region69: #{reverse.1} parent=42 // pred_fallthru
          _
      $region43: #{reverse.1} parent=38 // pred_fallthru
        _
      // Predicated region
      $region44: #{reverse.1} parent=38 // pred_check
        _
      $region45: #{reverse.1} parent=38 // pred_check_branch
        %179 = sbr.rel target = $region47
      $region46: #{reverse.1} parent=38 // pred_region
        %s181 = ssub.s32 256, 1
        loop: start=0, step=1, limit=1
        $region48: #{reverse.1} parent=46 // loop_pre_header
          _
        $region49: #{reverse.1} parent=46 // loop_header
          %s183 = sphi 0, %s187
          %p184 = scmp.ge.s32.totalorder %s183, 1
          %s188 = sphi [#allocation1], [#allocation1]
          %s189 = sphi %s1, %s1
        $region50: #{reverse.1} parent=46 // loop_header_branch
          %186 = sbr.rel (%p184) target = $region54
        $region51: #{reverse.1} parent=46 // loop_body
          %v190 = vld [vmem:[%s188] sm:%s181]
          %191 = vst [vmem:[%s189] sm:%s181] %v190
          %v192 = vld [vmem:[%s188 + $0x8] sm:%s181]
          %193 = vst [vmem:[%s189 + $0x8] sm:%s181] %v192
          %v194 = vld [vmem:[%s188 + $0x10] sm:%s181]
          %195 = vst [vmem:[%s189 + $0x10] sm:%s181] %v194
          %v196 = vld [vmem:[%s188 + $0x18] sm:%s181]
          %197 = vst [vmem:[%s189 + $0x18] sm:%s181] %v196
          %v198 = vld [vmem:[%s188 + $0x20] sm:%s181]
          %199 = vst [vmem:[%s189 + $0x20] sm:%s181] %v198
          %v200 = vld [vmem:[%s188 + $0x28] sm:%s181]
          %201 = vst [vmem:[%s189 + $0x28] sm:%s181] %v200
          %v202 = vld [vmem:[%s188 + $0x30] sm:%s181]
          %203 = vst [vmem:[%s189 + $0x30] sm:%s181] %v202
          %v204 = vld [vmem:[%s188 + $0x38] sm:%s181]
          %205 = vst [vmem:[%s189 + $0x38] sm:%s181] %v204
        $region52: #{reverse.1} parent=46 // loop_footer
          %s187 = sadd.s32 1, %s183
        $region53: #{reverse.1} parent=46 // loop_footer_branch
          %182 = sbr.rel target = $region49
        $region54: #{reverse.1} parent=46 // loop_exit
          _
      $region47: #{reverse.1} parent=38 // pred_fallthru
        _
    $region39: #{reverse.1} parent=1 // pred_fallthru
      _
    %234 = vnop

// kernel: _spectral_conv2d_forward.1
$region0: #{_spectral_conv2d_forward.1}
  #allocation0 [shape = 'u32[]', space=smem, size = 0x4, offset = 0x4, fixed_abs, tag = 'smem constant byte address 0x4 - core index']
  #allocation1 [shape = 'u32[144,128]{1,0:T(1,128)}', space=vmem, size = 0x12000, scoped, tag = 'internal scratch']
  %s0 = inlined_call_operand.vmem [shape: f32[2,4,128], index: 0, kind: input, shape index: {}]
  %s1 = inlined_call_operand.vmem [shape: f32[2,4,128], index: 1, kind: input, shape index: {}]
  %s2 = inlined_call_operand.vmem [shape: f32[4,4,128], index: 2, kind: input, shape index: {}]
  %s3 = inlined_call_operand.vmem [shape: f32[4,4,128], index: 3, kind: input, shape index: {}]
  %s4 = inlined_call_operand.vmem [shape: f32[4,4,128], index: 4, kind: input, shape index: {}]
  %s5 = inlined_call_operand.vmem [shape: f32[2,4,128], index: 5, kind: output, shape index: {0}]
  %s6 = inlined_call_operand.vmem [shape: f32[2,4,128], index: 6, kind: output, shape index: {1}]
  %7 = xla_tuple %s5, %s6
  %s8 = sld [smem:[#allocation0]]
  $region45: #{_spectral_conv2d_forward.1} parent=0
    _
  %s10 = ssub.s32 1, %s8
  %s11 = scalar_select 0, %s10, %s8
  // Predicated region
  $region2: #{_spectral_conv2d_forward.1} parent=0 // pred_check
    _
  $region3: #{_spectral_conv2d_forward.1} parent=0 // pred_check_branch
    %13 = sbr.rel (0) target = $region5
  $region4: #{_spectral_conv2d_forward.1} parent=0 // pred_region
    _
  $region5: #{_spectral_conv2d_forward.1} parent=0 // pred_fallthru
    _
  // Predicated region
  $region6: #{_spectral_conv2d_forward.1} parent=0 // pred_check
    _
  $region7: #{_spectral_conv2d_forward.1} parent=0 // pred_check_branch
    %15 = sbr.rel (0) target = $region9
  $region8: #{_spectral_conv2d_forward.1} parent=0 // pred_region
    _
  $region9: #{_spectral_conv2d_forward.1} parent=0 // pred_fallthru
    _
  // Predicated region
  $region10: #{_spectral_conv2d_forward.1} parent=0 // pred_check
    _
  $region11: #{_spectral_conv2d_forward.1} parent=0 // pred_check_branch
    %17 = sbr.rel (0) target = $region13
  $region12: #{_spectral_conv2d_forward.1} parent=0 // pred_region
    _
  $region13: #{_spectral_conv2d_forward.1} parent=0 // pred_fallthru
    _
  // Predicated region
  $region14: #{_spectral_conv2d_forward.1} parent=0 // pred_check
    _
  $region15: #{_spectral_conv2d_forward.1} parent=0 // pred_check_branch
    %19 = sbr.rel (0) target = $region17
  $region16: #{_spectral_conv2d_forward.1} parent=0 // pred_region
    _
  $region17: #{_spectral_conv2d_forward.1} parent=0 // pred_fallthru
    _
  // Predicated region
  $region18: #{_spectral_conv2d_forward.1} parent=0 // pred_check
    _
  $region19: #{_spectral_conv2d_forward.1} parent=0 // pred_check_branch
    %21 = sbr.rel (0) target = $region21
  $region20: #{_spectral_conv2d_forward.1} parent=0 // pred_region
    _
  $region21: #{_spectral_conv2d_forward.1} parent=0 // pred_fallthru
    _
  loop: start=0, step=1, limit=2
  $region22: #{_spectral_conv2d_forward.1} parent=0 // loop_pre_header
    _
  $region23: #{_spectral_conv2d_forward.1} parent=0 // loop_header
    %s23 = sphi 0, %s27
    %p24 = scmp.ge.s32.totalorder %s23, 2
  $region24: #{_spectral_conv2d_forward.1} parent=0 // loop_header_branch
    %26 = sbr.rel (%p24) target = $region28
  $region25: #{_spectral_conv2d_forward.1} parent=0 // loop_body
    %s28 = smul.u32 %s23, 4
    %s29 = scalar_lea.vmem %s0, %s28
    %v30 = vld [vmem:[%s29] sm:$0x1]
    %s31 = scalar_lea.vmem %s1, %s28
    %v32 = vld [vmem:[%s31] sm:$0x1]
    %v33 = vld [vmem:[%s2] sm:$0xf]
    %v34 = vld [vmem:[%s3] sm:$0xf]
    %v35 = vld [vmem:[%s4] sm:$0xf]
    %v36 = vadd.f32 %v30, %v32
    %v37 = vlaneseq
    %v38 = vshrl.u32 %v37, 7
    %v39 = vsub.s32 0, %v38
    %v40 = vrot.slane %v36, %v39
    %v41 = vmul.f32 %v33, %v40
    %v42 = vlaneseq
    %v43 = vshrl.u32 %v42, 7
    %v44 = vsub.s32 0, %v43
    %v45 = vrot.slane %v32, %v44
    %v46 = vmul.f32 %v35, %v45
    %v47 = vsub.f32 %v41, %v46
    %v48 = vadd.f32 %v47, 0.0
    %v49 = vlaneseq
    %v50 = vshrl.u32 %v49, 7
    %v51 = vsub.s32 0, %v50
    %v52 = vrot.slane %v30, %v51
    %v53 = vmul.f32 %v34, %v52
    %v54 = vadd.f32 %v41, %v53
    %v55 = vadd.f32 %v54, 0.0
    %v56 = vld [vmem:[%s29 + $0x1] sm:$0x1]
    %v57 = vld [vmem:[%s31 + $0x1] sm:$0x1]
    %s58 = scalar_lea.vmem %s2, 4
    %v59 = vld [vmem:[%s58] sm:$0xf]
    %s60 = scalar_lea.vmem %s3, 4
    %v61 = vld [vmem:[%s60] sm:$0xf]
    %s62 = scalar_lea.vmem %s4, 4
    %v63 = vld [vmem:[%s62] sm:$0xf]
    %v64 = vadd.f32 %v56, %v57
    %v65 = vlaneseq
    %v66 = vshrl.u32 %v65, 7
    %v67 = vsub.s32 0, %v66
    %v68 = vrot.slane %v64, %v67
    %v69 = vmul.f32 %v59, %v68
    %v70 = vlaneseq
    %v71 = vshrl.u32 %v70, 7
    %v72 = vsub.s32 0, %v71
    %v73 = vrot.slane %v57, %v72
    %v74 = vmul.f32 %v63, %v73
    %v75 = vsub.f32 %v69, %v74
    %v76 = vadd.f32 %v48, %v75
    %v77 = vlaneseq
    %v78 = vshrl.u32 %v77, 7
    %v79 = vsub.s32 0, %v78
    %v80 = vrot.slane %v56, %v79
    %v81 = vmul.f32 %v61, %v80
    %v82 = vadd.f32 %v69, %v81
    %v83 = vadd.f32 %v55, %v82
    %v84 = vld [vmem:[%s29 + $0x2] sm:$0x1]
    %v85 = vld [vmem:[%s31 + $0x2] sm:$0x1]
    %s86 = scalar_lea.vmem %s2, 8
    %v87 = vld [vmem:[%s86] sm:$0xf]
    %s88 = scalar_lea.vmem %s3, 8
    %v89 = vld [vmem:[%s88] sm:$0xf]
    %s90 = scalar_lea.vmem %s4, 8
    %v91 = vld [vmem:[%s90] sm:$0xf]
    %v92 = vadd.f32 %v84, %v85
    %v93 = vlaneseq
    %v94 = vshrl.u32 %v93, 7
    %v95 = vsub.s32 0, %v94
    %v96 = vrot.slane %v92, %v95
    %v97 = vmul.f32 %v87, %v96
    %v98 = vlaneseq
    %v99 = vshrl.u32 %v98, 7
    %v100 = vsub.s32 0, %v99
    %v101 = vrot.slane %v85, %v100
    %v102 = vmul.f32 %v91, %v101
    %v103 = vsub.f32 %v97, %v102
    %v104 = vadd.f32 %v76, %v103
    %v105 = vlaneseq
    %v106 = vshrl.u32 %v105, 7
    %v107 = vsub.s32 0, %v106
    %v108 = vrot.slane %v84, %v107
    %v109 = vmul.f32 %v89, %v108
    %v110 = vadd.f32 %v97, %v109
    %v111 = vadd.f32 %v83, %v110
    %v112 = vld [vmem:[%s29 + $0x3] sm:$0x1]
    %v113 = vld [vmem:[%s31 + $0x3] sm:$0x1]
    %s114 = scalar_lea.vmem %s2, 12
    %v115 = vld [vmem:[%s114] sm:$0xf]
    %s116 = scalar_lea.vmem %s3, 12
    %v117 = vld [vmem:[%s116] sm:$0xf]
    %s118 = scalar_lea.vmem %s4, 12
    %v119 = vld [vmem:[%s118] sm:$0xf]
    %v120 = vadd.f32 %v112, %v113
    %v121 = vlaneseq
    %v122 = vshrl.u32 %v121, 7
    %v123 = vsub.s32 0, %v122
    %v124 = vrot.slane %v120, %v123
    %v125 = vmul.f32 %v115, %v124
    %v126 = vlaneseq
    %v127 = vshrl.u32 %v126, 7
    %v128 = vsub.s32 0, %v127
    %v129 = vrot.slane %v113, %v128
    %v130 = vmul.f32 %v119, %v129
    %v131 = vsub.f32 %v125, %v130
    %v132 = vadd.f32 %v104, %v131
    %v133 = vlaneseq
    %v134 = vshrl.u32 %v133, 7
    %v135 = vsub.s32 0, %v134
    %v136 = vrot.slane %v112, %v135
    %v137 = vmul.f32 %v117, %v136
    %v138 = vadd.f32 %v125, %v137
    %v139 = vadd.f32 %v111, %v138
    %s140 = scalar_lea.vmem %s5, %s28
    %141 = vst [vmem:[%s140] sm:$0xf] %v132
    %s142 = scalar_lea.vmem %s6, %s28
    %143 = vst [vmem:[%s142] sm:$0xf] %v139
  $region26: #{_spectral_conv2d_forward.1} parent=0 // loop_footer
    %s27 = sadd.s32 1, %s23
  $region27: #{_spectral_conv2d_forward.1} parent=0 // loop_footer_branch
    %22 = sbr.rel target = $region23
  $region28: #{_spectral_conv2d_forward.1} parent=0 // loop_exit
    _
  // Predicated region
  $region29: #{_spectral_conv2d_forward.1} parent=0 // pred_check
    _
  $region30: #{_spectral_conv2d_forward.1} parent=0 // pred_check_branch
    %145 = sbr.rel (0) target = $region32
  $region31: #{_spectral_conv2d_forward.1} parent=0 // pred_region
    _
  $region32: #{_spectral_conv2d_forward.1} parent=0 // pred_fallthru
    _
  // Predicated region
  $region33: #{_spectral_conv2d_forward.1} parent=0 // pred_check
    _
  $region34: #{_spectral_conv2d_forward.1} parent=0 // pred_check_branch
    %147 = sbr.rel (0) target = $region36
  $region35: #{_spectral_conv2d_forward.1} parent=0 // pred_region
    _
  $region36: #{_spectral_conv2d_forward.1} parent=0 // pred_fallthru
    _
  // Predicated region
  $region37: #{_spectral_conv2d_forward.1} parent=0 // pred_check
    _
  $region38: #{_spectral_conv2d_forward.1} parent=0 // pred_check_branch
    %149 = sbr.rel (0) target = $region40
  $region39: #{_spectral_conv2d_forward.1} parent=0 // pred_region
    _
  $region40: #{_spectral_conv2d_forward.1} parent=0 // pred_fallthru
    _
  // Predicated region
  $region41: #{_spectral_conv2d_forward.1} parent=0 // pred_check
    _
  $region42: #{_spectral_conv2d_forward.1} parent=0 // pred_check_branch
    %151 = sbr.rel (0) target = $region44
  $region43: #{_spectral_conv2d_forward.1} parent=0 // pred_region
    _
  $region44: #{_spectral_conv2d_forward.1} parent=0 // pred_fallthru
    _

</llo_original>
